<compile_context>
chip_gen: v7x
topology: tpu7x:2x2x1
jax: 0.10.0
libtpu: 0.0.40
codegen_flags: <defaults>
</compile_context>

<pallas_src>
import functools

import jax
import jax.numpy as jnp
from jax.experimental import pallas as pl
from jax.experimental.pallas import tpu as pltpu


# ---------------------------------------------------------------------------
# Pass 1: sufficient statistics of X (column sums + Gram matrix).
# ---------------------------------------------------------------------------
def _x_moments_kernel(x_ref, s_ref, g_ref):
    """Accumulate s += row-sums(X) and G += X X^T from a (C_in, tl) tile of X in its
    native channel-major layout.  Accumulators stay VMEM-resident across the grid."""
    @pl.when(pl.program_id(0) + pl.program_id(1) == 0)
    def _():
        s_ref[...] = jnp.zeros_like(s_ref)
        g_ref[...] = jnp.zeros_like(g_ref)

    xt = x_ref[0]                                          # (C_in, tl), compute dtype
    # G += X X^T : contract the lane axis of both operands (standard QK^T-style matmul).
    g_ref[...] += jax.lax.dot_general(
        xt, xt, (((1,), (1,)), ((), ())), preferred_element_type=jnp.float32)
    s_ref[...] += jnp.sum(xt.astype(jnp.float32), axis=1, keepdims=True)


# ---------------------------------------------------------------------------
# Pass 2: fused transposed-conv matmul + BatchNorm affine + optional nonlinearity.
# ---------------------------------------------------------------------------
def _tconv_bn_kernel(x_ref, w_ref, shift_ref, o_ref, *, nonlin):
    """y = X_tile @ W_fold (BN scale pre-folded into W) + BN shift [+ nonlin].
    The big output tensor is written exactly once."""
    y = jnp.dot(x_ref[...], w_ref[...], preferred_element_type=jnp.float32)
    y = y + shift_ref[...]
    if nonlin == "relu":
        y = jnp.maximum(y, 0.0)
    elif callable(nonlin):
        # TODO(synk): arbitrary PyTorch callables are only supported if jnp-traceable and
        # Pallas-lowerable; None / "relu" are the tested paths.
        y = nonlin(y)
    o_ref[...] = y.astype(o_ref.dtype)


# ---------------------------------------------------------------------------
# Tiling helpers.
# ---------------------------------------------------------------------------
def _divisors(m):
    out = set()
    i = 1
    while i * i <= m:
        if m % i == 0:
            out.add(i)
            out.add(m // i)
        i += 1
    return sorted(out)


def _vmem_budget_bytes():
    cap = 64 * 1024 * 1024                    # conservative default = v7x physical VMEM
    try:
        cap = int(getattr(pltpu.get_tpu_info(), "vmem_capacity_bytes", cap))
    except Exception:
        pass
    # ~75% of physical VMEM: ~48 MiB on v7x (64 MiB), ~96 MiB on v5e/v6e (128 MiB).
    return (3 * cap) // 4


def _pick_row_tile(m, *, row_vmem_bytes, fixed_vmem_bytes, row_out_bytes,
                   target_out_bytes, budget_bytes):
    """Row tile tm: divides m, multiple of 8 (or == m), double-buffered footprint within
    the VMEM budget, and large enough that each grid step moves ~target_out_bytes of
    output (amortizes the ~0.35us per-step overhead)."""
    divs = _divisors(m)

    def fits(t):
        return t * row_vmem_bytes + fixed_vmem_bytes <= budget_bytes

    feasible = [t for t in divs if (t % 8 == 0 or t == m) and fits(t)]
    if not feasible:
        # TODO(synk): degenerate shapes where no multiple-of-8 divisor fits the budget;
        # fall back to the smallest legal tile.
        return min([t for t in divs if t % 8 == 0] or [m])
    target_rows = max(8, -(-target_out_bytes // max(row_out_bytes, 1)))
    geq = [t for t in feasible if t >= target_rows]
    tm = min(geq) if geq else max(feasible)
    # Prefer an even number of grid steps (balances the two v7x TensorCores) if that costs
    # at most a 2x smaller tile.
    if (m // tm) % 2 == 1 and (m // tm) > 1:
        alt = [t for t in feasible if (m // t) % 2 == 0 and 2 * t >= tm]
        if alt:
            tm = max(alt)
    return tm


def _pick_lane_tile(length, *, row_bytes, target_bytes, budget_bytes):
    """Lane tile along a trailing dim: divides `length`, multiple of 128 (or the full
    extent), double-buffered footprint within budget, ~target_bytes per step."""
    divs = _divisors(length)
    ok = [t for t in divs
          if (t % 128 == 0 or t == length) and 2 * t * row_bytes <= budget_bytes]
    if not ok:
        return length
    target = max(128, -(-target_bytes // max(row_bytes, 1)))
    geq = [t for t in ok if t >= target]
    return min(geq) if geq else max(ok)


# ---------------------------------------------------------------------------
# Forward pass.
# ---------------------------------------------------------------------------
def tconv_forward(x, weight, gamma, beta, *, nonlin=None, eps=1e-5,
                  compute_dtype=jnp.bfloat16):
    """Forward pass of TConv.

    x:      (N, C_in, D, H, W)   float32 (PyTorch NCDHW)
    weight: (C_in, C_out, 2, 2, 2)       (PyTorch ConvTranspose3d layout)
    gamma, beta: (C_out,)                (BatchNorm3d affine params)
    Returns (N, C_out, 2D, 2H, 2W), float32.
    BatchNorm uses training-mode batch statistics (biased variance), matching a freshly
    constructed module's forward.  Matmuls run in `compute_dtype` (bf16 by default) with
    f32 accumulation; BN statistics / folding are done in f32.
    """
    N, Cin, D, H, W = x.shape
    Cout = weight.shape[1]
    K8 = 8 * Cout
    # Lane-dense output columns: pad up to one full 128-lane vreg when K8 < 128 so that
    # pass-2 stores are unmasked; padded columns are sliced away before the final scatter.
    K8p = 128 if K8 < 128 else K8
    M = N * D * H * W
    DHW = D * H * W
    in_bytes = jnp.dtype(compute_dtype).itemsize
    budget = _vmem_budget_bytes()

    # Small-tensor layout work (M*Cin elements; negligible next to the 8*M*Cout output).
    x_nat = x.reshape(N, Cin, DHW).astype(compute_dtype)                  # native NC(DHW)
    x_flat = jnp.transpose(x, (0, 2, 3, 4, 1)).reshape(M, Cin).astype(compute_dtype)
    # (C_in, C_out, kd, kh, kw) -> (C_in, kd, kh, kw, C_out) -> (C_in, 8*C_out)
    w_flat = jnp.transpose(weight, (0, 2, 3, 4, 1)).reshape(Cin, K8).astype(jnp.float32)

    # ---- pass 1: column sums + Gram matrix of X (only X is read; the K8-wide conv output
    # is never formed for statistics).
    tl = _pick_lane_tile(DHW, row_bytes=Cin * in_bytes,
                         target_bytes=1 << 20, budget_bytes=budget)
    s_col, gram = pl.pallas_call(
        _x_moments_kernel,
        out_shape=(jax.ShapeDtypeStruct((Cin, 1), jnp.float32),
                   jax.ShapeDtypeStruct((Cin, Cin), jnp.float32)),
        grid_spec=pltpu.PrefetchScalarGridSpec(
            num_scalar_prefetch=0,
            grid=(N, DHW // tl),
            in_specs=[pl.BlockSpec((1, Cin, tl), lambda n, j: (n, 0, j))],
            out_specs=[pl.BlockSpec((Cin, 1), lambda n, j: (0, 0)),
                       pl.BlockSpec((Cin, Cin), lambda n, j: (0, 0))],
        ),
        compiler_params=pltpu.CompilerParams(
            dimension_semantics=("arbitrary", "arbitrary"),
            vmem_limit_bytes=budget),
    )(x_nat)

    # ---- glue (f32, C_out-sized): batch statistics of the conv output from (s, G), then
    # fold BN into the matmul.  Each output channel has 8*M elements (8 kernel positions).
    inv_m = 1.0 / jnp.float32(M)
    mu_x = s_col.reshape(Cin) * inv_m                     # mean of X rows            (Cin,)
    cov_x = gram * inv_m - jnp.outer(mu_x, mu_x)          # covariance of X rows  (Cin,Cin)
    w8 = w_flat.reshape(Cin, 8, Cout)
    mu_col = jnp.einsum("c,cko->ko", mu_x, w8)            # per-column conv means  (8,Cout)
    mean_c = mu_col.mean(axis=0)                          # channel batch mean      (Cout,)
    var_within = jnp.einsum("cko,cd,dko->ko", w8, cov_x, w8)      # centered quadratic form
    var_c = (var_within + (mu_col - mean_c[None, :]) ** 2).mean(axis=0)   # biased batch var
    inv_std = jax.lax.rsqrt(var_c + eps)
    scale_c = gamma.astype(jnp.float32) * inv_std
    shift_c = beta.astype(jnp.float32) - mean_c * scale_c

    w_fold = w_flat * jnp.tile(scale_c, 8)[None, :]       # BN scale folded into W
    shift_col = jnp.tile(shift_c, 8)
    if K8p != K8:
        w_fold = jnp.pad(w_fold, ((0, 0), (0, K8p - K8)))
        shift_col = jnp.pad(shift_col, (0, K8p - K8))
    w_fold = w_fold.astype(compute_dtype)
    shift_col = shift_col.reshape(1, K8p).astype(jnp.float32)

    # ---- pass 2: fused matmul + BN + nonlin.  The 8x-upsampled tensor is written once.
    row_vmem = 2 * Cin * in_bytes + 2 * K8p * 4           # double-buffered in + out rows
    fixed_vmem = Cin * K8p * in_bytes + K8p * 4 + (1 << 16)
    tm = _pick_row_tile(M, row_vmem_bytes=row_vmem, fixed_vmem_bytes=fixed_vmem,
                        row_out_bytes=K8p * 4, target_out_bytes=4 << 20,
                        budget_bytes=budget)
    steps = M // tm

    y_flat = pl.pallas_call(
        functools.partial(_tconv_bn_kernel, nonlin=nonlin),
        out_shape=jax.ShapeDtypeStruct((M, K8p), jnp.float32),
        grid_spec=pltpu.PrefetchScalarGridSpec(
            num_scalar_prefetch=0,
            grid=(steps,),
            in_specs=[pl.BlockSpec((tm, Cin), lambda i: (i, 0)),
                      pl.BlockSpec((Cin, K8p), lambda i: (0, 0)),
                      pl.BlockSpec((1, K8p), lambda i: (0, 0))],
            out_specs=pl.BlockSpec((tm, K8p), lambda i: (i, 0)),
        ),
        compiler_params=pltpu.CompilerParams(
            dimension_semantics=("parallel",),
            vmem_limit_bytes=budget),
    )(x_flat, w_fold, shift_col)

    if K8p != K8:
        y_flat = y_flat[:, :K8]

    # ---- scatter the 8 kernel-position column groups into NCDHW at 2x resolution.
    # TODO(synk): this XLA transpose re-reads/re-writes the 8x tensor once more; fusing it
    # into pass 2 requires a lane-level (w, kw) stride-2 interleave (strided stores or bf16
    # bitcast packing), which is not attempted here.
    y = y_flat.reshape(N, D, H, W, 2, 2, 2, Cout)
    y = jnp.transpose(y, (0, 7, 1, 4, 2, 5, 3, 6))
    return y.reshape(N, Cout, 2 * D, 2 * H, 2 * W)


def tconv_reference(x, weight, gamma, beta, *, nonlin=None, eps=1e-5):
    """Pure-JAX reference for ConvTranspose3d(k=2,s=2,bias=False) + BatchNorm3d."""
    N, Cin, D, H, W = x.shape
    Cout = weight.shape[1]
    # out[n, co, 2d+p, 2h+q, 2w+r] = sum_c x[n,c,d,h,w] * W[c,co,p,q,r]
    y = jnp.einsum("ncdhw,copqr->ndphqwro", x, weight)
    y = y.reshape(N, 2 * D, 2 * H, 2 * W, Cout)
    y = jnp.transpose(y, (0, 4, 1, 2, 3))
    mean = y.mean(axis=(0, 2, 3, 4), keepdims=True)
    var = y.var(axis=(0, 2, 3, 4), keepdims=True)   # biased, as in training-mode BN
    g = gamma.reshape(1, Cout, 1, 1, 1)
    b = beta.reshape(1, Cout, 1, 1, 1)
    y = (y - mean) / jnp.sqrt(var + eps) * g + b
    if nonlin == "relu":
        y = jnp.maximum(y, 0.0)
    return y


if __name__ == "__main__":
    key = jax.random.PRNGKey(0)
    k1, k2, k3, k4 = jax.random.split(key, 4)

    # Case 1: Cout multiple of 16 (K8 already lane-dense).
    N, Cin, Cout, D, H, W = 2, 4, 16, 8, 8, 8
    x = jax.random.normal(k1, (N, Cin, D, H, W), dtype=jnp.float32)
    weight = jax.random.normal(k2, (Cin, Cout, 2, 2, 2), dtype=jnp.float32) * 0.25
    gamma = jnp.ones((Cout,), jnp.float32)   # BatchNorm3d default init
    beta = jnp.zeros((Cout,), jnp.float32)

    out = tconv_forward(x, weight, gamma, beta, nonlin=None)
    jax.block_until_ready(out)
    ref = tconv_reference(x, weight, gamma, beta, nonlin=None)
    assert out.shape == (N, Cout, 2 * D, 2 * H, 2 * W), out.shape
    # bf16 matmul inputs / f32 accumulation vs f32 reference: ~1e-3-level differences.
    assert jnp.allclose(out, ref, atol=2e-2, rtol=2e-2), float(jnp.max(jnp.abs(out - ref)))

    out_r = tconv_forward(x, weight, gamma, beta, nonlin="relu")
    jax.block_until_ready(out_r)
    ref_r = tconv_reference(x, weight, gamma, beta, nonlin="relu")
    assert jnp.allclose(out_r, ref_r, atol=2e-2, rtol=2e-2), float(jnp.max(jnp.abs(out_r - ref_r)))

    # Case 2: Cout < 16 (K8 < 128) exercises the lane-padding path; odd Cin.
    N2, Cin2, Cout2, D2, H2, W2 = 1, 3, 8, 4, 4, 4
    x2 = jax.random.normal(k3, (N2, Cin2, D2, H2, W2), dtype=jnp.float32)
    w2 = jax.random.normal(k4, (Cin2, Cout2, 2, 2, 2), dtype=jnp.float32) * 0.25
    g2 = jnp.ones((Cout2,), jnp.float32)
    b2 = jnp.zeros((Cout2,), jnp.float32)
    out2 = tconv_forward(x2, w2, g2, b2, nonlin="relu")
    jax.block_until_ready(out2)
    ref2 = tconv_reference(x2, w2, g2, b2, nonlin="relu")
    assert out2.shape == (N2, Cout2, 2 * D2, 2 * H2, 2 * W2), out2.shape
    assert jnp.allclose(out2, ref2, atol=2e-2, rtol=2e-2), float(jnp.max(jnp.abs(out2 - ref2)))

    print("KERNEL_OK")
</pallas_src>

<mosaic_0001>
module attributes {stable_mosaic.version = 11 : i64} {
  func.func @_x_moments_kernel(%arg0: i32, %arg1: i32, %arg2: memref<1x4x512xbf16, #tpu.memory_space<vmem>>, %arg3: memref<4x1xf32, #tpu.memory_space<vmem>>, %arg4: memref<4x4xf32, #tpu.memory_space<vmem>>) attributes {dimension_semantics = [#tpu.dimension_semantics<arbitrary>, #tpu.dimension_semantics<arbitrary>], iteration_bounds = array<i64: 2, 1>, scalar_prefetch = 0 : i64, scratch_operands = 0 : i64, tpu.core_type = #tpu.core_type<tc>, window_params = [{transform_indices = @transform_0, window_bounds = array<i64: 1, 4, 512>}, {pipeline_mode = #tpu.pipeline_mode<synchronous>, transform_indices = @transform_1, window_bounds = array<i64: 4, 1>}, {pipeline_mode = #tpu.pipeline_mode<synchronous>, transform_indices = @transform_2, window_bounds = array<i64: 4, 4>}]} {
    %0 = arith.addi %arg0, %arg1 : i32
    %c0_i32 = arith.constant 0 : i32
    %1 = arith.cmpi eq, %0, %c0_i32 : i32
    %2 = arith.extui %1 : i1 to i32
    %c0_i32_0 = arith.constant 0 : i32
    %3 = arith.cmpi ne, %2, %c0_i32_0 : i32
    scf.if %3 {
      %cst_12 = arith.constant 0.000000e+00 : f32
      %16 = vector.broadcast %cst_12 : f32 to vector<4x1xf32>
      %c0_13 = arith.constant 0 : index
      %c0_14 = arith.constant 0 : index
      %17 = vector.load %arg3[%c0_13, %c0_14] : memref<4x1xf32, #tpu.memory_space<vmem>>, vector<4x1xf32>
      tpu.vector_store %arg3[%c0_13, %c0_14], %16 {strides = array<i32>} : memref<4x1xf32, #tpu.memory_space<vmem>>, vector<4x1xf32>,
      %cst_15 = arith.constant 0.000000e+00 : f32
      %18 = vector.broadcast %cst_15 : f32 to vector<4x4xf32>
      %c0_16 = arith.constant 0 : index
      %c0_17 = arith.constant 0 : index
      %19 = vector.load %arg4[%c0_16, %c0_17] : memref<4x4xf32, #tpu.memory_space<vmem>>, vector<4x4xf32>
      tpu.vector_store %arg4[%c0_16, %c0_17], %18 {strides = array<i32>} : memref<4x4xf32, #tpu.memory_space<vmem>>, vector<4x4xf32>,
    } else {
    }
    %c0 = arith.constant 0 : index
    %c0_1 = arith.constant 0 : index
    %c0_2 = arith.constant 0 : index
    %4 = vector.load %arg2[%c0, %c0_1, %c0_2] : memref<1x4x512xbf16, #tpu.memory_space<vmem>>, vector<1x4x512xbf16>
    %5 = vector.shape_cast %4 : vector<1x4x512xbf16> to vector<4x512xbf16>
    %c0_3 = arith.constant 0 : index
    %c0_4 = arith.constant 0 : index
    %6 = vector.load %arg4[%c0_3, %c0_4] : memref<4x4xf32, #tpu.memory_space<vmem>>, vector<4x4xf32>
    %cst = arith.constant dense<0.000000e+00> : vector<4x4xf32>
    %7 = tpu.matmul %5, %5, %cst {dimension_numbers = #tpu.dot_dimension_numbers<[1], [1], [0], [0], [0, 0, 1, 0], [], []>} : vector<4x512xbf16>, vector<4x512xbf16>, vector<4x4xf32> -> vector<4x4xf32>
    %8 = arith.addf %6, %7 : vector<4x4xf32>
    %c0_5 = arith.constant 0 : index
    %c0_6 = arith.constant 0 : index
    %9 = vector.load %arg4[%c0_5, %c0_6] : memref<4x4xf32, #tpu.memory_space<vmem>>, vector<4x4xf32>
    tpu.vector_store %arg4[%c0_5, %c0_6], %8 {strides = array<i32>} : memref<4x4xf32, #tpu.memory_space<vmem>>, vector<4x4xf32>,
    %c0_7 = arith.constant 0 : index
    %c0_8 = arith.constant 0 : index
    %10 = vector.load %arg3[%c0_7, %c0_8] : memref<4x1xf32, #tpu.memory_space<vmem>>, vector<4x1xf32>
    %11 = arith.extf %5 : vector<4x512xbf16> to vector<4x512xf32>
    %cst_9 = arith.constant dense<0.000000e+00> : vector<4xf32>
    %12 = vector.multi_reduction <add>, %11, %cst_9 [1] : vector<4x512xf32> to vector<4xf32>
    %13 = vector.shape_cast %12 : vector<4xf32> to vector<4x1xf32>
    %14 = arith.addf %10, %13 : vector<4x1xf32>
    %c0_10 = arith.constant 0 : index
    %c0_11 = arith.constant 0 : index
    %15 = vector.load %arg3[%c0_10, %c0_11] : memref<4x1xf32, #tpu.memory_space<vmem>>, vector<4x1xf32>
    tpu.vector_store %arg3[%c0_10, %c0_11], %14 {strides = array<i32>} : memref<4x1xf32, #tpu.memory_space<vmem>>, vector<4x1xf32>,
    return
  }
  func.func @transform_0(%arg0: i32, %arg1: i32) -> (i32, i32, i32) {
    %c0_i32 = arith.constant 0 : i32
    %c0_i32_0 = arith.constant 0 : i32
    return %arg0, %c0_i32, %arg1 : i32, i32, i32
  }
  func.func @transform_1(%arg0: i32, %arg1: i32) -> (i32, i32) {
    %c0_i32 = arith.constant 0 : i32
    %c0_i32_0 = arith.constant 0 : i32
    %c0_i32_1 = arith.constant 0 : i32
    return %c0_i32, %c0_i32_0 : i32, i32
  }
  func.func @transform_2(%arg0: i32, %arg1: i32) -> (i32, i32) {
    %c0_i32 = arith.constant 0 : i32
    %c0_i32_0 = arith.constant 0 : i32
    %c0_i32_1 = arith.constant 0 : i32
    return %c0_i32, %c0_i32_0 : i32, i32
  }
}

</mosaic_0001>

<llo_original>
// kernel: tpu_custom_call.1
$region0: #{tpu_custom_call.1}
  #allocation0 [shape = 'u32[]', space=smem, size = 0x4, offset = 0x4, fixed_abs, tag = 'smem constant byte address 0x4 - core index']
  #allocation1 [shape = 'u32[144,128]{1,0:T(1,128)}', space=vmem, size = 0x12000, scoped, tag = 'internal scratch']
  %s0 = inlined_call_operand.hbm [shape: bf16[2,4,512], index: 0, kind: input, shape index: {}]
  %s1 = inlined_call_operand.vmem [shape: f32[4,1], index: 1, kind: output, shape index: {0}]
  %s2 = inlined_call_operand.hbm [shape: f32[4,4], index: 2, kind: output, shape index: {1}]
  %3 = xla_tuple %s1, %s2
  %s4 = sld [smem:[#allocation0]]
  $region53: #{tpu_custom_call.1} parent=0
    _
  %s6 = ssub.s32 1, %s4
  %s7 = scalar_select 0, %s6, %s4
  $region1: #{tpu_custom_call.1} parent=0
    #allocation2 [shape = 'u8[8192]{0}', space=vmem, size = 0x2000, scoped, tag = 'input window, operand 0']
    #allocation3 [shape = 's32[2]{0}', space=sflag, size = 0x8, scoped, tag = 'scoped memory for tpu_custom_call.1']
    #allocation4 [shape = 's32[2]{0}', space=sflag, size = 0x8, scoped, tag = 'scoped memory for tpu_custom_call.1']
    #allocation5 [shape = 'u8[2048]{0}', space=vmem, size = 0x800, scoped, tag = 'output window, operand 1, single buffered']
    %8 = vsyncpa [#allocation3], 0
    %s9 = scalar_lea.sflag [#allocation3], 1
    %10 = vsyncpa %s9, 0
    %11 = vsyncpa [#allocation4], 0
    loop: start=0, step=1, limit=4
    $region2: #{tpu_custom_call.1} parent=1 // loop_pre_header
      _
    $region3: #{tpu_custom_call.1} parent=1 // loop_header
      %s13 = sphi 0, %s17
      %p14 = scmp.ge.s32.totalorder %s13, 4
      %s20 = sphi 0, %s32
      %s21 = sphi 0, %s28
      %s22 = sphi 0, %s20
      %s23 = sphi 0, %s21
      %s24 = sphi 0, %s22
      %s25 = sphi 0, %s23
      %s37 = sphi 0, %s39
      %s40 = sphi 0, %s37
      %s41 = sphi 0, %s40
      %s57 = sphi 0, %s41
      %s61 = sphi 0, %s61
      %s63 = sphi 0, %s61
      %s64 = sphi 0, %s63
      %s78 = sphi 0, %s64
      %s82 = sphi 0, %s82
      %s84 = sphi 0, %s82
      %s85 = sphi 0, %s84
      %s99 = sphi 0, %s85
    $region4: #{tpu_custom_call.1} parent=1 // loop_header_branch
      %16 = sbr.rel (%p14) target = $region8
    $region5: #{tpu_custom_call.1} parent=1 // loop_body
      %s18 = ssub.s32 %s13, 1
      %s19 = ssub.s32 %s13, 2
      %s26 = sadd.s32 1, %s21
      %p27 = scmp.ge.s32.totalorder %s26, 1
      %s28 = scalar_select %p27, 0, %s26
      %s29 = sadd.s32 1, %s20
      %s30 = scalar_select %p27, %s29, %s20
      %p31 = scmp.ge.s32.totalorder %s30, 2
      %s32 = scalar_select %p31, 0, %s30
      %s33 = ssub.s32 %s20, %s32
      %s34 = ssub.s32 %s21, %s28
      %s35 = sor.u32 %s33, %s34
      %p36 = scmp.eq.s32.totalorder %s35, 0
      %s38 = sadd.s32 %s37, 1
      %s39 = scalar_select %p36, %s37, %s38
      %p42 = pneg %p36
      %p43 = scmp.eq.s32.totalorder %s13, 1
      %p44 = por %p42, %p43
      %p45 = scmp.ne.s32.totalorder %s37, %s40
      %p46 = scmp.eq.s32.totalorder %s13, 0
      %p47 = por %p45, %p46
      %p48 = scmp.ne.s32.totalorder %s37, %s40
      %p49 = scmp.eq.s32.totalorder %s18, 1
      %p50 = por %p48, %p49
      %p51 = scmp.ne.s32.totalorder %s40, %s41
      %p52 = scmp.eq.s32.totalorder %s18, 0
      %p53 = por %p51, %p52
      %p54 = scmp.ne.s32.totalorder %s40, %s41
      %p55 = scmp.eq.s32.totalorder %s19, 1
      %p56 = por %p54, %p55
      %p58 = scmp.ne.s32.totalorder %s41, %s57
      %p59 = scmp.eq.s32.totalorder %s19, 0
      %p60 = por %p58, %p59
      %s62 = sadd.s32 %s61, 1
      %p65 = scmp.eq.s32.totalorder %s13, 1
      %p66 = scmp.ne.s32.totalorder %s61, %s63
      %p67 = scmp.eq.s32.totalorder %s13, 0
      %p68 = por %p66, %p67
      %p69 = scmp.ne.s32.totalorder %s61, %s63
      %p70 = scmp.eq.s32.totalorder %s18, 1
      %p71 = por %p69, %p70
      %p72 = scmp.ne.s32.totalorder %s63, %s64
      %p73 = scmp.eq.s32.totalorder %s18, 0
      %p74 = por %p72, %p73
      %p75 = scmp.ne.s32.totalorder %s63, %s64
      %p76 = scmp.eq.s32.totalorder %s19, 1
      %p77 = por %p75, %p76
      %p79 = scmp.ne.s32.totalorder %s64, %s78
      %p80 = scmp.eq.s32.totalorder %s19, 0
      %p81 = por %p79, %p80
      %s83 = sadd.s32 %s82, 1
      %p86 = scmp.eq.s32.totalorder %s13, 1
      %p87 = scmp.ne.s32.totalorder %s82, %s84
      %p88 = scmp.eq.s32.totalorder %s13, 0
      %p89 = por %p87, %p88
      %p90 = scmp.ne.s32.totalorder %s82, %s84
      %p91 = scmp.eq.s32.totalorder %s18, 1
      %p92 = por %p90, %p91
      %p93 = scmp.ne.s32.totalorder %s84, %s85
      %p94 = scmp.eq.s32.totalorder %s18, 0
      %p95 = por %p93, %p94
      %p96 = scmp.ne.s32.totalorder %s84, %s85
      %p97 = scmp.eq.s32.totalorder %s19, 1
      %p98 = por %p96, %p97
      %p100 = scmp.ne.s32.totalorder %s85, %s99
      %p101 = scmp.eq.s32.totalorder %s19, 0
      %p102 = por %p100, %p101
      %p103 = scmp.le.s32.totalorder 1, %s13
      %p104 = scmp.lt.s32.totalorder %s13, 3
      %p105 = pnand %p103, %p104
      %p106 = pneg %p105
      // Predicated region
      $region9: #{tpu_custom_call.1} parent=5 // pred_check
        _
      $region10: #{tpu_custom_call.1} parent=5 // pred_check_branch
        %108 = sbr.rel (%p105) target = $region12
      $region11: #{tpu_custom_call.1} parent=5 // pred_region
        %s109 = ssub.s32 %s13, 1
      $region12: #{tpu_custom_call.1} parent=5 // pred_fallthru
        _
      %p110 = scmp.lt.s32.totalorder %s13, 2
      // Predicated region
      $region13: #{tpu_custom_call.1} parent=5 // pred_check
        %p111 = pneg %p110
      $region14: #{tpu_custom_call.1} parent=5 // pred_check_branch
        %113 = sbr.rel (%p111) target = $region16
      $region15: #{tpu_custom_call.1} parent=5 // pred_region
        // Predicated region
        $region17: #{tpu_custom_call.1} parent=15 // pred_check
          %p114 = pneg %p47
        $region18: #{tpu_custom_call.1} parent=15 // pred_check_branch
          %116 = sbr.rel (%p114) target = $region20
        $region19: #{tpu_custom_call.1} parent=15 // pred_region
          %s117 = sand.u32 %s37, 1
          %s118 = scalar_lea.sflag [#allocation3], %s117
          %s119 = sand.u32 %s37, 1
          %s120 = smul.addr %s119, 8
          %s121 = scalar_lea.vmem [#allocation2], %s120
          %s122 = smul.u32 4, %s21
          %s124 = ssub.s32 128, 128
          %125 = vsyncadd %s118, %s124
          %s126 = smul.addr %s20, 4
          %s127 = sadd.s32 %s122, %s126
          %s128 = smul.addr %s127, 32
          %s129 = scalar_lea.hbm %s0, %s128
          %s131 = sshll.u32 %s121, 4
          %s132 = int_to_ptr.vmem [resolvable:$true] %s131
          %134 = dma.hbm_to_vmem [thread:$0]  %s129, 128, %s132, %s118
        $region20: #{tpu_custom_call.1} parent=15 // pred_fallthru
          _
      $region16: #{tpu_custom_call.1} parent=5 // pred_fallthru
        _
      %p135 = scmp.le.s32.totalorder 1, %s13
      %p136 = scmp.lt.s32.totalorder %s13, 3
      %p137 = pnand %p135, %p136
      %p138 = pneg %p137
      // Predicated region
      $region21: #{tpu_custom_call.1} parent=5 // pred_check
        _
      $region22: #{tpu_custom_call.1} parent=5 // pred_check_branch
        %140 = sbr.rel (%p137) target = $region24
      $region23: #{tpu_custom_call.1} parent=5 // pred_region
        %s141 = ssub.s32 %s13, 1
        %s142 = sand.u32 %s40, 1
        %s143 = scalar_lea.sflag [#allocation3], %s142
        %s144 = sand.u32 %s40, 1
        %s145 = smul.addr %s144, 8
        %s146 = scalar_lea.vmem [#allocation2], %s145
        // Predicated region
        $region25: #{tpu_custom_call.1} parent=23 // pred_check
          %p147 = pneg %p53
        $region26: #{tpu_custom_call.1} parent=23 // pred_check_branch
          %149 = sbr.rel (%p147) target = $region28
        $region27: #{tpu_custom_call.1} parent=23 // pred_region
          %150 = dma.done %s143, 128
        $region28: #{tpu_custom_call.1} parent=23 // pred_fallthru
          _
        %s151 = sand.u32 %s40, 1
        %s152 = scalar_lea.sflag [#allocation3], %s151
        %s153 = sand.u32 %s40, 1
        %s154 = smul.addr %s153, 8
        %s155 = scalar_lea.vmem [#allocation2], %s154
        %p156 = pneg %p53
        %p157 = pneg %p50
        %p158 = pneg %p74
        %p159 = pneg %p71
        %p160 = pneg %p95
        %p161 = pneg %p92
        %s162 = smul.u32 4, %s23
        %s164 = sadd.s32 %s22, %s23
        %p165 = scmp.eq.s32.totalorder %s164, 0
        // Predicated region
        $region29: #{tpu_custom_call.1} parent=23 // pred_check
          %p166 = pneg %p165
        $region30: #{tpu_custom_call.1} parent=23 // pred_check_branch
          %168 = sbr.rel (%p166) target = $region32
        $region31: #{tpu_custom_call.1} parent=23 // pred_region
          %vm169 = vcmask 3072
          %170 = vst.msk [vmem:[%s1] sm:$0xf] %vm169, 0.0
          %vm171 = vcmask 27648
          %172 = vst.msk [vmem:[#allocation5] sm:$0xf] %vm171, 0.0
        $region32: #{tpu_custom_call.1} parent=23 // pred_fallthru
          _
        %v173 = vld [vmem:[%s146] sm:$0xff]
        %v174 = vld [vmem:[#allocation5] sm:$0xf]
        %v176 = vcombine.high %v173, %v173
        %v178 = vunpack.c.l.s4 1983009808
        %v179 = vunpack.c.0.s8 %v178
        %v180 = vlaneseq
        %v181 = vshrl.u32 %v180, 7
        %v182 = vsub.s32 %v179, %v181
        %v183 = vrot.slane %v173, %v182
        %v185 = vunpack.c.l.s4 1983009808
        %v186 = vunpack.c.0.s8 %v185
        %v187 = vlaneseq
        %v188 = vshrl.u32 %v187, 7
        %v189 = vsub.s32 %v186, %v188
        %v190 = vrot.slane %v176, %v189
        %v191 = vcombine.high %v183, %v183
        %v192 = vcombine.high %v190, %v190
        %197 = vmatprep.subr.bf16.mxu0 %v191
        %198 = vmatpush1.bf16.xpose.msra.mxu0 %v183
        %199 = vmatprep.subr.bf16.mxu0 0
        %200 = vmatpush1.bf16.xpose.msra.mxu0 0
        %201 = vmatprep.subr.bf16.mxu0 0
        %202 = vmatpush1.bf16.xpose.msra.mxu0 0
        %203 = vmatprep.subr.bf16.mxu0 0
        %204 = vmatpush1.bf16.xpose.msra.mxu0 0
        %205 = vmatprep.subr.bf16.mxu0 0
        %206 = vmatpush1.bf16.xpose.msra.mxu0 0
        %207 = vmatprep.subr.bf16.mxu0 0
        %208 = vmatpush1.bf16.xpose.msra.mxu0 0
        %209 = vmatprep.subr.bf16.mxu0 0
        %210 = vmatpush1.bf16.xpose.msra.mxu0 0
        %211 = vmatprep.subr.bf16.mxu0 0
        %212 = vmatpush1.bf16.xpose.msra.mxu0 0
        %213 = vmatprep.subr.bf16.mxu0 0
        %214 = vmatpush1.bf16.xpose.msra.mxu0 0
        %215 = vmatprep.subr.bf16.mxu0 0
        %216 = vmatpush1.bf16.xpose.msra.mxu0 0
        %217 = vmatprep.subr.bf16.mxu0 0
        %218 = vmatpush1.bf16.xpose.msra.mxu0 0
        %219 = vmatprep.subr.bf16.mxu0 0
        %220 = vmatpush1.bf16.xpose.msra.mxu0 0
        %221 = vmatprep.subr.bf16.mxu0 0
        %222 = vmatpush1.bf16.xpose.msra.mxu0 0
        %223 = vmatprep.subr.bf16.mxu0 0
        %224 = vmatpush1.bf16.xpose.msra.mxu0 0
        %225 = vmatprep.subr.bf16.mxu0 0
        %226 = vmatpush1.bf16.xpose.msra.mxu0 0
        %227 = vmatprep.subr.bf16.mxu0 0
        %228 = vmatpush1.bf16.xpose.msra.mxu0 0
        %229 = vmatprep.mubr.bf16.mxu0 %v191
        %230 = vmatmul.mubr.bf16.gmra.mrb[0].mxu0 %v183
        %v231 = vpop.f32.mrb[0].mxu0
        %v232 = vadd.f32 0.0, %v231
        %v233 = vpop.f32.mrb[0].mxu0
        %v234 = vpop.f32.mrb[0].mxu0
        %v235 = vpop.f32.mrb[0].mxu0
        %236 = vdwg.mxu0
        %237 = vmatprep.subr.bf16.mxu0 %v192
        %238 = vmatpush1.bf16.xpose.msra.mxu0 %v190
        %239 = vmatprep.subr.bf16.mxu0 0
        %240 = vmatpush1.bf16.xpose.msra.mxu0 0
        %241 = vmatprep.subr.bf16.mxu0 0
        %242 = vmatpush1.bf16.xpose.msra.mxu0 0
        %243 = vmatprep.subr.bf16.mxu0 0
        %244 = vmatpush1.bf16.xpose.msra.mxu0 0
        %245 = vmatprep.subr.bf16.mxu0 0
        %246 = vmatpush1.bf16.xpose.msra.mxu0 0
        %247 = vmatprep.subr.bf16.mxu0 0
        %248 = vmatpush1.bf16.xpose.msra.mxu0 0
        %249 = vmatprep.subr.bf16.mxu0 0
        %250 = vmatpush1.bf16.xpose.msra.mxu0 0
        %251 = vmatprep.subr.bf16.mxu0 0
        %252 = vmatpush1.bf16.xpose.msra.mxu0 0
        %253 = vmatprep.subr.bf16.mxu0 0
        %254 = vmatpush1.bf16.xpose.msra.mxu0 0
        %255 = vmatprep.subr.bf16.mxu0 0
        %256 = vmatpush1.bf16.xpose.msra.mxu0 0
        %257 = vmatprep.subr.bf16.mxu0 0
        %258 = vmatpush1.bf16.xpose.msra.mxu0 0
        %259 = vmatprep.subr.bf16.mxu0 0
        %260 = vmatpush1.bf16.xpose.msra.mxu0 0
        %261 = vmatprep.subr.bf16.mxu0 0
        %262 = vmatpush1.bf16.xpose.msra.mxu0 0
        %263 = vmatprep.subr.bf16.mxu0 0
        %264 = vmatpush1.bf16.xpose.msra.mxu0 0
        %265 = vmatprep.subr.bf16.mxu0 0
        %266 = vmatpush1.bf16.xpose.msra.mxu0 0
        %267 = vmatprep.subr.bf16.mxu0 0
        %268 = vmatpush1.bf16.xpose.msra.mxu0 0
        %269 = vmatprep.mubr.bf16.mxu0 %v192
        %270 = vmatmul.mubr.bf16.gmra.mrb[0].mxu0 %v190
        %v271 = vpop.f32.mrb[0].mxu0
        %v272 = vadd.f32 %v232, %v271
        %v273 = vpop.f32.mrb[0].mxu0
        %v274 = vpop.f32.mrb[0].mxu0
        %v275 = vpop.f32.mrb[0].mxu0
        %276 = vdwg.mxu0
        %v277 = vadd.f32 %v174, %v272
        %vm278 = vcmask 27648
        %279 = vst.msk [vmem:[#allocation5] sm:$0xf] %vm278, %v277
        %v280 = vld [vmem:[%s1] sm:$0xf]
        %v281 = vunpack.c.l.bf16 %v173
        %v282 = vunpack.c.h.bf16 %v173
        %v285 = vcombine.high %v281, %v281
        %v286 = vcombine.high %v282, %v282
        %vm289 = vcmask 1043456
        %v290 = vsel %vm289, %v281, 0.0
        %v291 = vsel %vm289, %v285, 0.0
        %v292 = vadd.f32 %v290, %v291
        %v293 = vsel %vm289, %v282, 0.0
        %v294 = vadd.f32 %v292, %v293
        %v295 = vsel %vm289, %v286, 0.0
        %v296 = vadd.f32 %v294, %v295
        %297 = vadd.xlane.f32.xlu0 %v296
        %v298 = vpop.xlane.xlu0 %297
        %v299 = vadd.f32 %v280, %v298
        %vm300 = vcmask 3072
        %301 = vst.msk [vmem:[%s1] sm:$0xf] %vm300, %v299
        // Predicated region
        $region33: #{tpu_custom_call.1} parent=23 // pred_check
          %p302 = pneg %p71
        $region34: #{tpu_custom_call.1} parent=23 // pred_check_branch
          %304 = sbr.rel (%p302) target = $region36
        $region35: #{tpu_custom_call.1} parent=23 // pred_region
          _
        $region36: #{tpu_custom_call.1} parent=23 // pred_fallthru
          _
        // Predicated region
        $region37: #{tpu_custom_call.1} parent=23 // pred_check
          %p305 = pneg %p92
        $region38: #{tpu_custom_call.1} parent=23 // pred_check_branch
          %307 = sbr.rel (%p305) target = $region40
        $region39: #{tpu_custom_call.1} parent=23 // pred_region
          %s309 = ssub.s32 64, 64
          %310 = vsyncadd [#allocation4], %s309
          %s312 = sshll.u32 [#allocation5], 4
          %s313 = int_to_ptr.vmem [resolvable:$true] %s312
          %315 = dma.vmem_to_hbm [thread:$0]  %s313, 64, %s2, [#allocation4]
        $region40: #{tpu_custom_call.1} parent=23 // pred_fallthru
          _
        // Predicated region
        $region41: #{tpu_custom_call.1} parent=23 // pred_check
          %p316 = pneg %p71
        $region42: #{tpu_custom_call.1} parent=23 // pred_check_branch
          %318 = sbr.rel (%p316) target = $region44
        $region43: #{tpu_custom_call.1} parent=23 // pred_region
          _
        $region44: #{tpu_custom_call.1} parent=23 // pred_fallthru
          _
        // Predicated region
        $region45: #{tpu_custom_call.1} parent=23 // pred_check
          %p319 = pneg %p92
        $region46: #{tpu_custom_call.1} parent=23 // pred_check_branch
          %321 = sbr.rel (%p319) target = $region48
        $region47: #{tpu_custom_call.1} parent=23 // pred_region
          %322 = dma.done [#allocation4], 64
        $region48: #{tpu_custom_call.1} parent=23 // pred_fallthru
          _
      $region24: #{tpu_custom_call.1} parent=5 // pred_fallthru
        _
      %p323 = scmp.le.s32.totalorder 2, %s13
      // Predicated region
      $region49: #{tpu_custom_call.1} parent=5 // pred_check
        %p324 = pneg %p323
      $region50: #{tpu_custom_call.1} parent=5 // pred_check_branch
        %326 = sbr.rel (%p324) target = $region52
      $region51: #{tpu_custom_call.1} parent=5 // pred_region
        %s327 = ssub.s32 %s13, 2
      $region52: #{tpu_custom_call.1} parent=5 // pred_fallthru
        _
    $region6: #{tpu_custom_call.1} parent=1 // loop_footer
      %s17 = sadd.s32 1, %s13
    $region7: #{tpu_custom_call.1} parent=1 // loop_footer_branch
      %12 = sbr.rel target = $region3
    $region8: #{tpu_custom_call.1} parent=1 // loop_exit
      _
    %328 = vsyncpa [#allocation3], 1
    %s329 = scalar_lea.sflag [#allocation3], 1
    %330 = vsyncpa %s329, 1
    %331 = vsyncpa [#allocation4], 1
    %s332 = scalar_lea.sflag [#allocation4], 1
    %333 = vsyncpa %s332, 1

</llo_original>
